<compile_context>
chip_gen: v7x
topology: tpu7x:2x2x1
jax: 0.10.0
libtpu: 0.0.40
codegen_flags: <defaults>
</compile_context>

<pallas_src>
import functools

import jax
import jax.numpy as jnp
from jax.experimental import pallas as pl
from jax.experimental.pallas import tpu as pltpu

_LANES = 128


def _round_up(x, m):
    return ((x + m - 1) // m) * m


def _vmem_capacity_bytes():
    try:
        return int(pltpu.get_tpu_info().vmem_capacity_bytes)
    except Exception:
        return 64 * 1024 * 1024  # conservative fallback (v7x per-core VMEM)


def _auto_block_rows(itemsize_max, vmem_cap):
    # 5 streams (param, grad, m, v, out) x double-buffered pipeline.
    budget = min(vmem_cap // 3, 48 * 1024 * 1024)
    per_buffer = budget // (5 * 2)
    rows = per_buffer // (_LANES * itemsize_max)
    return int(max(512, min(8192, rows)))


def _adam_kernel(s_ref, p_ref, g_ref, m_ref, v_ref, out_ref):
    # Runtime scalars from SMEM (free scalar-slot reads, no recompile per step).
    beta1 = s_ref[0]
    beta2 = s_ref[1]
    eps = s_ref[2]
    c1 = s_ref[3]   # lr / (1 - beta1**step)
    c2 = s_ref[4]   # 1 / sqrt(1 - beta2**step)

    # Load in native dtype, upcast in-register (keeps HBM traffic minimal).
    p = p_ref[...].astype(jnp.float32)
    g = g_ref[...].astype(jnp.float32)
    m = m_ref[...].astype(jnp.float32)
    v = v_ref[...].astype(jnp.float32)

    m_new = beta1 * m + (1.0 - beta1) * g
    v_new = beta2 * v + (1.0 - beta2) * (g * g)

    # lr * m_hat / (sqrt(v_hat) + eps) == c1 * m_new / (sqrt(v_new) * c2 + eps)
    denom = jnp.sqrt(v_new) * c2 + eps
    out_ref[...] = (p - c1 * m_new / denom).astype(out_ref.dtype)


def adam_update(param, grad, m, v, step, *, beta1=0.9, beta2=0.999,
                lr=0.001, eps=1e-8, block_rows=None):
    """Returns the updated param (matches the PyTorch Model.forward)."""
    orig_shape = param.shape
    orig_dtype = param.dtype

    # ---- step-dependent constants as *runtime* scalars (traced, no recompile)
    step_f = jnp.asarray(step, jnp.float32)
    b1 = jnp.asarray(beta1, jnp.float32)
    b2 = jnp.asarray(beta2, jnp.float32)
    c1 = jnp.asarray(lr, jnp.float32) / (1.0 - b1 ** step_f)
    c2 = jax.lax.rsqrt(1.0 - b2 ** step_f)
    scalars = jnp.stack([b1, b2, jnp.asarray(eps, jnp.float32), c1, c2])

    # ---- slab / tiling geometry
    n = param.size
    rows_raw = max(1, -(-n // _LANES))          # ceil(n / 128)

    # dtype-dependent min sublane tile (8 f32 / 16 bf16 / 32 int8).
    min_sub = 8
    itemsize_max = 1
    for x in (param, grad, m, v):
        isz = jnp.dtype(x.dtype).itemsize
        itemsize_max = max(itemsize_max, isz)
        min_sub = max(min_sub, 8 * max(1, 4 // isz))

    rows = _round_up(rows_raw, min_sub)          # pad only to the min tile
    padded_n = rows * _LANES

    vmem_cap = _vmem_capacity_bytes()
    if block_rows is None:
        block_rows = _auto_block_rows(itemsize_max, vmem_cap)

    eff_block = _round_up(min(int(block_rows), rows), min_sub)
    if rows >= 2 * min_sub:
        # Guarantee >= 2 grid blocks so megacore (v7x) can split the work.
        half = _round_up(-(-rows // 2), min_sub)
        eff_block = min(eff_block, half)
    eff_block = max(min_sub, min(eff_block, rows))

    grid = (pl.cdiv(rows, eff_block),)           # ragged last block is fine

    def to2d(x):
        flat = jnp.ravel(x)
        if padded_n != n:
            flat = jnp.pad(flat, (0, padded_n - n))
        return flat.reshape(rows, _LANES)

    p2, g2, m2, v2 = to2d(param), to2d(grad), to2d(m), to2d(v)

    tile_spec = pl.BlockSpec((eff_block, _LANES), lambda i: (i, 0))
    smem_spec = pl.BlockSpec(memory_space=pltpu.MemorySpace.SMEM)

    # VMEM budget: 5 streams x 2 pipeline buffers x block bytes, generation-aware.
    working = 5 * 2 * eff_block * _LANES * itemsize_max
    vmem_limit = int(min(max(2 * working, 32 * 1024 * 1024),
                         (vmem_cap * 3) // 4))

    # TODO(synk): if a v7x trace shows exposed DMA issue latency at the short
    # per-step times, add pipeline_mode=pl.Buffered(3) to the input specs.
    out2 = pl.pallas_call(
        _adam_kernel,
        out_shape=jax.ShapeDtypeStruct((rows, _LANES), orig_dtype),
        grid_spec=pltpu.PrefetchScalarGridSpec(
            num_scalar_prefetch=0,
            grid=grid,
            in_specs=[smem_spec, tile_spec, tile_spec, tile_spec, tile_spec],
            out_specs=tile_spec,
        ),
        input_output_aliases={1: 0},   # param slab updated in-place style
        compiler_params=pltpu.CompilerParams(
            dimension_semantics=("parallel",),
            vmem_limit_bytes=vmem_limit),
    )(scalars, p2, g2, m2, v2)

    out_flat = out2.reshape(-1)
    if padded_n != n:
        out_flat = out_flat[:n]
    return out_flat.reshape(orig_shape)


if __name__ == "__main__":
    key = jax.random.PRNGKey(0)
    k1, k2, k3, k4 = jax.random.split(key, 4)

    # Small synthetic tensors: 2*4*16*16 = 2048 elements (= 16 x 128 slab).
    shape = (2, 4, 16, 16)
    param = jax.random.normal(k1, shape, dtype=jnp.float32)
    grad = jax.random.normal(k2, shape, dtype=jnp.float32)
    m = jax.random.normal(k3, shape, dtype=jnp.float32) * 0.1
    v = jnp.abs(jax.random.normal(k4, shape, dtype=jnp.float32)) * 0.1

    beta1, beta2, lr, eps = 0.9, 0.999, 0.001, 1e-8

    adam_fn = jax.jit(functools.partial(
        adam_update, beta1=beta1, beta2=beta2, lr=lr, eps=eps))

    step = 1
    out = adam_fn(param, grad, m, v, jnp.int32(step))
    out = jax.block_until_ready(out)

    # A second call with a different step reuses the same executable
    # (step-dependent constants are runtime scalars, not baked-in).
    _ = jax.block_until_ready(adam_fn(param, grad, m, v, jnp.int32(2)))

    # Pure-JAX reference (mirrors the PyTorch Model.forward) for step=1.
    m_ref = beta1 * m + (1 - beta1) * grad
    v_ref = beta2 * v + (1 - beta2) * jnp.square(grad)
    m_hat = m_ref / (1 - beta1 ** step)
    v_hat = v_ref / (1 - beta2 ** step)
    ref = param - lr * m_hat / (jnp.sqrt(v_hat) + eps)

    assert out.shape == param.shape and out.dtype == param.dtype
    assert jnp.allclose(out, ref, atol=1e-5, rtol=1e-5), (
        float(jnp.max(jnp.abs(out - ref))))

    print("KERNEL_OK")
</pallas_src>

<mosaic_0001>
module attributes {stable_mosaic.version = 11 : i64} {
  func.func @_adam_kernel(%arg0: i32, %arg1: memref<5xf32, #tpu.memory_space<smem>>, %arg2: memref<8x128xf32, #tpu.memory_space<vmem>>, %arg3: memref<8x128xf32, #tpu.memory_space<vmem>>, %arg4: memref<8x128xf32, #tpu.memory_space<vmem>>, %arg5: memref<8x128xf32, #tpu.memory_space<vmem>>, %arg6: memref<8x128xf32, #tpu.memory_space<vmem>>) attributes {dimension_semantics = [#tpu.dimension_semantics<parallel>], iteration_bounds = array<i64: 2>, scalar_prefetch = 0 : i64, scratch_operands = 0 : i64, tpu.core_type = #tpu.core_type<tc>, window_params = [{transform_indices = @transform_0, window_bounds = array<i64: 5>}, {transform_indices = @transform_1, window_bounds = array<i64: 8, 128>}, {transform_indices = @transform_2, window_bounds = array<i64: 8, 128>}, {transform_indices = @transform_3, window_bounds = array<i64: 8, 128>}, {transform_indices = @transform_4, window_bounds = array<i64: 8, 128>}, {transform_indices = @transform_5, window_bounds = array<i64: 8, 128>}]} {
    %c0 = arith.constant 0 : index
    %0 = memref.load %arg1[%c0] : memref<5xf32, #tpu.memory_space<smem>>
    %c1 = arith.constant 1 : index
    %1 = memref.load %arg1[%c1] : memref<5xf32, #tpu.memory_space<smem>>
    %c2 = arith.constant 2 : index
    %2 = memref.load %arg1[%c2] : memref<5xf32, #tpu.memory_space<smem>>
    %c3 = arith.constant 3 : index
    %3 = memref.load %arg1[%c3] : memref<5xf32, #tpu.memory_space<smem>>
    %c4 = arith.constant 4 : index
    %4 = memref.load %arg1[%c4] : memref<5xf32, #tpu.memory_space<smem>>
    %c0_0 = arith.constant 0 : index
    %c0_1 = arith.constant 0 : index
    %5 = vector.load %arg2[%c0_0, %c0_1] : memref<8x128xf32, #tpu.memory_space<vmem>>, vector<8x128xf32>
    %c0_2 = arith.constant 0 : index
    %c0_3 = arith.constant 0 : index
    %6 = vector.load %arg3[%c0_2, %c0_3] : memref<8x128xf32, #tpu.memory_space<vmem>>, vector<8x128xf32>
    %c0_4 = arith.constant 0 : index
    %c0_5 = arith.constant 0 : index
    %7 = vector.load %arg4[%c0_4, %c0_5] : memref<8x128xf32, #tpu.memory_space<vmem>>, vector<8x128xf32>
    %c0_6 = arith.constant 0 : index
    %c0_7 = arith.constant 0 : index
    %8 = vector.load %arg5[%c0_6, %c0_7] : memref<8x128xf32, #tpu.memory_space<vmem>>, vector<8x128xf32>
    %9 = vector.broadcast %0 : f32 to vector<8x128xf32>
    %10 = arith.mulf %9, %7 : vector<8x128xf32>
    %cst = arith.constant 1.000000e+00 : f32
    %11 = arith.subf %cst, %0 : f32
    %12 = vector.broadcast %11 : f32 to vector<8x128xf32>
    %13 = arith.mulf %12, %6 : vector<8x128xf32>
    %14 = arith.addf %10, %13 : vector<8x128xf32>
    %15 = vector.broadcast %1 : f32 to vector<8x128xf32>
    %16 = arith.mulf %15, %8 : vector<8x128xf32>
    %cst_8 = arith.constant 1.000000e+00 : f32
    %17 = arith.subf %cst_8, %1 : f32
    %18 = arith.mulf %6, %6 : vector<8x128xf32>
    %19 = vector.broadcast %17 : f32 to vector<8x128xf32>
    %20 = arith.mulf %19, %18 : vector<8x128xf32>
    %21 = arith.addf %16, %20 : vector<8x128xf32>
    %22 = math.sqrt %21 : vector<8x128xf32>
    %23 = vector.broadcast %4 : f32 to vector<8x128xf32>
    %24 = arith.mulf %22, %23 : vector<8x128xf32>
    %25 = vector.broadcast %2 : f32 to vector<8x128xf32>
    %26 = arith.addf %24, %25 : vector<8x128xf32>
    %27 = vector.broadcast %3 : f32 to vector<8x128xf32>
    %28 = arith.mulf %27, %14 : vector<8x128xf32>
    %29 = arith.divf %28, %26 : vector<8x128xf32>
    %30 = arith.subf %5, %29 : vector<8x128xf32>
    %c0_9 = arith.constant 0 : index
    %c0_10 = arith.constant 0 : index
    %31 = vector.load %arg6[%c0_9, %c0_10] : memref<8x128xf32, #tpu.memory_space<vmem>>, vector<8x128xf32>
    tpu.vector_store %arg6[%c0_9, %c0_10], %30 {strides = array<i32>} : memref<8x128xf32, #tpu.memory_space<vmem>>, vector<8x128xf32>,
    return
  }
  func.func @transform_0(%arg0: i32) -> i32 {
    %c0_i32 = arith.constant 0 : i32
    %c0_i32_0 = arith.constant 0 : i32
    return %c0_i32 : i32
  }
  func.func @transform_1(%arg0: i32) -> (i32, i32) {
    %c0_i32 = arith.constant 0 : i32
    %c0_i32_0 = arith.constant 0 : i32
    return %arg0, %c0_i32 : i32, i32
  }
  func.func @transform_2(%arg0: i32) -> (i32, i32) {
    %c0_i32 = arith.constant 0 : i32
    %c0_i32_0 = arith.constant 0 : i32
    return %arg0, %c0_i32 : i32, i32
  }
  func.func @transform_3(%arg0: i32) -> (i32, i32) {
    %c0_i32 = arith.constant 0 : i32
    %c0_i32_0 = arith.constant 0 : i32
    return %arg0, %c0_i32 : i32, i32
  }
  func.func @transform_4(%arg0: i32) -> (i32, i32) {
    %c0_i32 = arith.constant 0 : i32
    %c0_i32_0 = arith.constant 0 : i32
    return %arg0, %c0_i32 : i32, i32
  }
  func.func @transform_5(%arg0: i32) -> (i32, i32) {
    %c0_i32 = arith.constant 0 : i32
    %c0_i32_0 = arith.constant 0 : i32
    return %arg0, %c0_i32 : i32, i32
  }
}

</mosaic_0001>

<llo_original>
// kernel: adam_update.1
$region0: #{adam_update.1}
  #allocation0 [shape = 'u32[]', space=smem, size = 0x4, offset = 0x4, fixed_abs, tag = 'smem constant byte address 0x4 - core index']
  #allocation1 [shape = 'u32[144,128]{1,0:T(1,128)}', space=vmem, size = 0x12000, scoped, tag = 'internal scratch']
  %s0 = inlined_call_operand.vmem [shape: f32[5], index: 0, kind: input, shape index: {}]
  %s1 = inlined_call_operand.vmem [shape: f32[16,128], index: 1, kind: input, shape index: {}, may-alias: {1,5}]
  %s2 = inlined_call_operand.vmem [shape: f32[16,128], index: 2, kind: input, shape index: {}]
  %s3 = inlined_call_operand.vmem [shape: f32[16,128], index: 3, kind: input, shape index: {}]
  %s4 = inlined_call_operand.vmem [shape: f32[16,128], index: 4, kind: input, shape index: {}]
  %s5 = inlined_call_operand.vmem [shape: f32[16,128], index: 5, kind: output, shape index: {}, may-alias: {1,5}]
  %s6 = sld [smem:[#allocation0]]
  $region57: #{adam_update.1} parent=0
    _
  %s8 = ssub.s32 1, %s6
  %s9 = scalar_select 0, %s8, %s6
  $region1: #{adam_update.1} parent=0
    #allocation2 [shape = 'u8[512]{0}', space=smem, size = 0x200, scoped, tag = 'input window, operand 0, single buffered']
    #allocation3 [shape = 's32[2]{0}', space=sflag, size = 0x8, scoped, tag = 'scoped memory for adam_update.1']
    %10 = vsyncpa [#allocation3], 0
    loop: start=0, step=1, limit=4
    $region2: #{adam_update.1} parent=1 // loop_pre_header
      _
    $region3: #{adam_update.1} parent=1 // loop_header
      %s12 = sphi 0, %s16
      %p13 = scmp.ge.s32.totalorder %s12, 4
      %s20 = sphi 0, %s20
      %s22 = sphi 0, %s20
      %s23 = sphi 0, %s22
      %s37 = sphi 0, %s23
      %s43 = sphi 0, %s45
      %s46 = sphi 0, %s43
      %s47 = sphi 0, %s46
      %s63 = sphi 0, %s47
      %s69 = sphi 0, %s71
      %s72 = sphi 0, %s69
      %s73 = sphi 0, %s72
      %s89 = sphi 0, %s73
      %s95 = sphi 0, %s97
      %s98 = sphi 0, %s95
      %s99 = sphi 0, %s98
      %s115 = sphi 0, %s99
      %s121 = sphi 0, %s123
      %s124 = sphi 0, %s121
      %s125 = sphi 0, %s124
      %s141 = sphi 0, %s125
      %s147 = sphi 0, %s149
      %s150 = sphi 0, %s147
      %s151 = sphi 0, %s150
      %s167 = sphi 0, %s151
    $region4: #{adam_update.1} parent=1 // loop_header_branch
      %15 = sbr.rel (%p13) target = $region8
    $region5: #{adam_update.1} parent=1 // loop_body
      %s17 = ssub.s32 %s12, 1
      %s18 = ssub.s32 %s12, 2
      %s19 = sadd.s32 %s12, 1
      %s21 = sadd.s32 %s20, 1
      %p24 = scmp.eq.s32.totalorder %s12, 1
      %p25 = scmp.ne.s32.totalorder %s20, %s22
      %p26 = scmp.eq.s32.totalorder %s12, 0
      %p27 = por %p25, %p26
      %p28 = scmp.ne.s32.totalorder %s20, %s22
      %p29 = scmp.eq.s32.totalorder %s17, 1
      %p30 = por %p28, %p29
      %p31 = scmp.ne.s32.totalorder %s22, %s23
      %p32 = scmp.eq.s32.totalorder %s17, 0
      %p33 = por %p31, %p32
      %p34 = scmp.ne.s32.totalorder %s22, %s23
      %p35 = scmp.eq.s32.totalorder %s18, 1
      %p36 = por %p34, %p35
      %p38 = scmp.ne.s32.totalorder %s23, %s37
      %p39 = scmp.eq.s32.totalorder %s18, 0
      %p40 = por %p38, %p39
      %s41 = ssub.s32 %s12, %s19
      %p42 = scmp.eq.s32.totalorder %s41, 0
      %s44 = sadd.s32 %s43, 1
      %s45 = scalar_select %p42, %s43, %s44
      %p48 = pneg %p42
      %p49 = scmp.eq.s32.totalorder %s12, 1
      %p50 = por %p48, %p49
      %p51 = scmp.ne.s32.totalorder %s43, %s46
      %p52 = scmp.eq.s32.totalorder %s12, 0
      %p53 = por %p51, %p52
      %p54 = scmp.ne.s32.totalorder %s43, %s46
      %p55 = scmp.eq.s32.totalorder %s17, 1
      %p56 = por %p54, %p55
      %p57 = scmp.ne.s32.totalorder %s46, %s47
      %p58 = scmp.eq.s32.totalorder %s17, 0
      %p59 = por %p57, %p58
      %p60 = scmp.ne.s32.totalorder %s46, %s47
      %p61 = scmp.eq.s32.totalorder %s18, 1
      %p62 = por %p60, %p61
      %p64 = scmp.ne.s32.totalorder %s47, %s63
      %p65 = scmp.eq.s32.totalorder %s18, 0
      %p66 = por %p64, %p65
      %s67 = ssub.s32 %s12, %s19
      %p68 = scmp.eq.s32.totalorder %s67, 0
      %s70 = sadd.s32 %s69, 1
      %s71 = scalar_select %p68, %s69, %s70
      %p74 = pneg %p68
      %p75 = scmp.eq.s32.totalorder %s12, 1
      %p76 = por %p74, %p75
      %p77 = scmp.ne.s32.totalorder %s69, %s72
      %p78 = scmp.eq.s32.totalorder %s12, 0
      %p79 = por %p77, %p78
      %p80 = scmp.ne.s32.totalorder %s69, %s72
      %p81 = scmp.eq.s32.totalorder %s17, 1
      %p82 = por %p80, %p81
      %p83 = scmp.ne.s32.totalorder %s72, %s73
      %p84 = scmp.eq.s32.totalorder %s17, 0
      %p85 = por %p83, %p84
      %p86 = scmp.ne.s32.totalorder %s72, %s73
      %p87 = scmp.eq.s32.totalorder %s18, 1
      %p88 = por %p86, %p87
      %p90 = scmp.ne.s32.totalorder %s73, %s89
      %p91 = scmp.eq.s32.totalorder %s18, 0
      %p92 = por %p90, %p91
      %s93 = ssub.s32 %s12, %s19
      %p94 = scmp.eq.s32.totalorder %s93, 0
      %s96 = sadd.s32 %s95, 1
      %s97 = scalar_select %p94, %s95, %s96
      %p100 = pneg %p94
      %p101 = scmp.eq.s32.totalorder %s12, 1
      %p102 = por %p100, %p101
      %p103 = scmp.ne.s32.totalorder %s95, %s98
      %p104 = scmp.eq.s32.totalorder %s12, 0
      %p105 = por %p103, %p104
      %p106 = scmp.ne.s32.totalorder %s95, %s98
      %p107 = scmp.eq.s32.totalorder %s17, 1
      %p108 = por %p106, %p107
      %p109 = scmp.ne.s32.totalorder %s98, %s99
      %p110 = scmp.eq.s32.totalorder %s17, 0
      %p111 = por %p109, %p110
      %p112 = scmp.ne.s32.totalorder %s98, %s99
      %p113 = scmp.eq.s32.totalorder %s18, 1
      %p114 = por %p112, %p113
      %p116 = scmp.ne.s32.totalorder %s99, %s115
      %p117 = scmp.eq.s32.totalorder %s18, 0
      %p118 = por %p116, %p117
      %s119 = ssub.s32 %s12, %s19
      %p120 = scmp.eq.s32.totalorder %s119, 0
      %s122 = sadd.s32 %s121, 1
      %s123 = scalar_select %p120, %s121, %s122
      %p126 = pneg %p120
      %p127 = scmp.eq.s32.totalorder %s12, 1
      %p128 = por %p126, %p127
      %p129 = scmp.ne.s32.totalorder %s121, %s124
      %p130 = scmp.eq.s32.totalorder %s12, 0
      %p131 = por %p129, %p130
      %p132 = scmp.ne.s32.totalorder %s121, %s124
      %p133 = scmp.eq.s32.totalorder %s17, 1
      %p134 = por %p132, %p133
      %p135 = scmp.ne.s32.totalorder %s124, %s125
      %p136 = scmp.eq.s32.totalorder %s17, 0
      %p137 = por %p135, %p136
      %p138 = scmp.ne.s32.totalorder %s124, %s125
      %p139 = scmp.eq.s32.totalorder %s18, 1
      %p140 = por %p138, %p139
      %p142 = scmp.ne.s32.totalorder %s125, %s141
      %p143 = scmp.eq.s32.totalorder %s18, 0
      %p144 = por %p142, %p143
      %s145 = ssub.s32 %s12, %s19
      %p146 = scmp.eq.s32.totalorder %s145, 0
      %s148 = sadd.s32 %s147, 1
      %s149 = scalar_select %p146, %s147, %s148
      %p152 = pneg %p146
      %p153 = scmp.eq.s32.totalorder %s12, 1
      %p154 = por %p152, %p153
      %p155 = scmp.ne.s32.totalorder %s147, %s150
      %p156 = scmp.eq.s32.totalorder %s12, 0
      %p157 = por %p155, %p156
      %p158 = scmp.ne.s32.totalorder %s147, %s150
      %p159 = scmp.eq.s32.totalorder %s17, 1
      %p160 = por %p158, %p159
      %p161 = scmp.ne.s32.totalorder %s150, %s151
      %p162 = scmp.eq.s32.totalorder %s17, 0
      %p163 = por %p161, %p162
      %p164 = scmp.ne.s32.totalorder %s150, %s151
      %p165 = scmp.eq.s32.totalorder %s18, 1
      %p166 = por %p164, %p165
      %p168 = scmp.ne.s32.totalorder %s151, %s167
      %p169 = scmp.eq.s32.totalorder %s18, 0
      %p170 = por %p168, %p169
      %p171 = scmp.le.s32.totalorder 1, %s12
      %p172 = scmp.lt.s32.totalorder %s12, 3
      %p173 = pnand %p171, %p172
      %p174 = pneg %p173
      // Predicated region
      $region9: #{adam_update.1} parent=5 // pred_check
        _
      $region10: #{adam_update.1} parent=5 // pred_check_branch
        %176 = sbr.rel (%p173) target = $region12
      $region11: #{adam_update.1} parent=5 // pred_region
        %s177 = ssub.s32 %s12, 1
        // Predicated region
        $region13: #{adam_update.1} parent=11 // pred_check
          %p178 = pneg %p33
        $region14: #{adam_update.1} parent=11 // pred_check_branch
          %180 = sbr.rel (%p178) target = $region16
        $region15: #{adam_update.1} parent=11 // pred_region
          %s182 = ssub.s32 16, 16
          %183 = vsyncadd [#allocation3], %s182
          %s185 = sshll.u32 %s0, 4
          %s186 = int_to_ptr.vmem [resolvable:$true] %s185
          %188 = dma.vmem_to_smem %s186, 16, [#allocation2], [#allocation3]
        $region16: #{adam_update.1} parent=11 // pred_fallthru
          _
      $region12: #{adam_update.1} parent=5 // pred_fallthru
        _
      %p189 = scmp.lt.s32.totalorder %s12, 2
      // Predicated region
      $region17: #{adam_update.1} parent=5 // pred_check
        %p190 = pneg %p189
      $region18: #{adam_update.1} parent=5 // pred_check_branch
        %192 = sbr.rel (%p190) target = $region20
      $region19: #{adam_update.1} parent=5 // pred_region
        // Predicated region
        $region21: #{adam_update.1} parent=19 // pred_check
          %p193 = pneg %p53
        $region22: #{adam_update.1} parent=19 // pred_check_branch
          %195 = sbr.rel (%p193) target = $region24
        $region23: #{adam_update.1} parent=19 // pred_region
          %p196 = scmp.lt.s32.totalorder %s12, 1
          %s197 = scalar_select %p196, %s12, 1
          %s198 = smul.addr %s197, 8
          %s199 = scalar_lea.vmem %s1, %s198
        $region24: #{adam_update.1} parent=19 // pred_fallthru
          _
        // Predicated region
        $region25: #{adam_update.1} parent=19 // pred_check
          %p200 = pneg %p79
        $region26: #{adam_update.1} parent=19 // pred_check_branch
          %202 = sbr.rel (%p200) target = $region28
        $region27: #{adam_update.1} parent=19 // pred_region
          %p203 = scmp.lt.s32.totalorder %s12, 1
          %s204 = scalar_select %p203, %s12, 1
          %s205 = smul.addr %s204, 8
          %s206 = scalar_lea.vmem %s2, %s205
        $region28: #{adam_update.1} parent=19 // pred_fallthru
          _
        // Predicated region
        $region29: #{adam_update.1} parent=19 // pred_check
          %p207 = pneg %p105
        $region30: #{adam_update.1} parent=19 // pred_check_branch
          %209 = sbr.rel (%p207) target = $region32
        $region31: #{adam_update.1} parent=19 // pred_region
          %p210 = scmp.lt.s32.totalorder %s12, 1
          %s211 = scalar_select %p210, %s12, 1
          %s212 = smul.addr %s211, 8
          %s213 = scalar_lea.vmem %s3, %s212
        $region32: #{adam_update.1} parent=19 // pred_fallthru
          _
        // Predicated region
        $region33: #{adam_update.1} parent=19 // pred_check
          %p214 = pneg %p131
        $region34: #{adam_update.1} parent=19 // pred_check_branch
          %216 = sbr.rel (%p214) target = $region36
        $region35: #{adam_update.1} parent=19 // pred_region
          %p217 = scmp.lt.s32.totalorder %s12, 1
          %s218 = scalar_select %p217, %s12, 1
          %s219 = smul.addr %s218, 8
          %s220 = scalar_lea.vmem %s4, %s219
        $region36: #{adam_update.1} parent=19 // pred_fallthru
          _
      $region20: #{adam_update.1} parent=5 // pred_fallthru
        _
      %p221 = scmp.le.s32.totalorder 1, %s12
      %p222 = scmp.lt.s32.totalorder %s12, 3
      %p223 = pnand %p221, %p222
      %p224 = pneg %p223
      // Predicated region
      $region37: #{adam_update.1} parent=5 // pred_check
        _
      $region38: #{adam_update.1} parent=5 // pred_check_branch
        %226 = sbr.rel (%p223) target = $region40
      $region39: #{adam_update.1} parent=5 // pred_region
        %s227 = ssub.s32 %s12, 1
        // Predicated region
        $region41: #{adam_update.1} parent=39 // pred_check
          %p228 = pneg %p33
        $region42: #{adam_update.1} parent=39 // pred_check_branch
          %230 = sbr.rel (%p228) target = $region44
        $region43: #{adam_update.1} parent=39 // pred_region
          %231 = dma.done [#allocation3], 16
        $region44: #{adam_update.1} parent=39 // pred_fallthru
          _
        %232 = sfence
        %p233 = pneg %p33
        %p234 = pneg %p30
        %p235 = scmp.lt.s32.totalorder %s17, 1
        %s236 = scalar_select %p235, %s17, 1
        %s237 = smul.addr %s236, 8
        %s238 = scalar_lea.vmem %s1, %s237
        %p239 = pneg %p59
        %p240 = pneg %p56
        %p241 = scmp.lt.s32.totalorder %s17, 1
        %s242 = scalar_select %p241, %s17, 1
        %s243 = smul.addr %s242, 8
        %s244 = scalar_lea.vmem %s2, %s243
        %p245 = pneg %p85
        %p246 = pneg %p82
        %p247 = scmp.lt.s32.totalorder %s17, 1
        %s248 = scalar_select %p247, %s17, 1
        %s249 = smul.addr %s248, 8
        %s250 = scalar_lea.vmem %s3, %s249
        %p251 = pneg %p111
        %p252 = pneg %p108
        %p253 = scmp.lt.s32.totalorder %s17, 1
        %s254 = scalar_select %p253, %s17, 1
        %s255 = smul.addr %s254, 8
        %s256 = scalar_lea.vmem %s4, %s255
        %p257 = pneg %p137
        %p258 = pneg %p134
        %p259 = pneg %p163
        %p260 = pneg %p160
        %p261 = scmp.lt.s32.totalorder %s17, 1
        %s262 = scalar_select %p261, %s17, 1
        %s263 = smul.addr %s262, 8
        %s264 = scalar_lea.vmem %s5, %s263
        %p265 = scmp.lt.s32.totalorder %s17, 1
        %s266 = scalar_select %p265, %s17, 1
        %s267 = smul.addr %s266, 8
        %s268 = scalar_lea.vmem %s1, %s267
        %p269 = scmp.lt.s32.totalorder %s17, 1
        %s270 = scalar_select %p269, %s17, 1
        %s271 = smul.addr %s270, 8
        %s272 = scalar_lea.vmem %s2, %s271
        %p273 = scmp.lt.s32.totalorder %s17, 1
        %s274 = scalar_select %p273, %s17, 1
        %s275 = smul.addr %s274, 8
        %s276 = scalar_lea.vmem %s3, %s275
        %p277 = scmp.lt.s32.totalorder %s17, 1
        %s278 = scalar_select %p277, %s17, 1
        %s279 = smul.addr %s278, 8
        %s280 = scalar_lea.vmem %s4, %s279
        %p281 = scmp.lt.s32.totalorder %s17, 1
        %s282 = scalar_select %p281, %s17, 1
        %s283 = smul.addr %s282, 8
        %s284 = scalar_lea.vmem %s5, %s283
        %s285 = sld [smem:[#allocation2]]
        %s286 = sld [smem:[#allocation2 + $0x1]]
        %s287 = sld [smem:[#allocation2 + $0x2]]
        %s288 = sld [smem:[#allocation2 + $0x3]]
        %s289 = sld [smem:[#allocation2 + $0x4]]
        %v290 = vld [vmem:[%s268] sm:$0xff]
        %v291 = vld [vmem:[%s272] sm:$0xff]
        %v292 = vld [vmem:[%s276] sm:$0xff]
        %v293 = vld [vmem:[%s280] sm:$0xff]
        %v294 = vstv %s285
        %v295 = vmul.f32 %v294, %v292
        %s296 = ssub.f32 1.0, %s285
        %v297 = vstv %s296
        %v298 = vmul.f32 %v297, %v291
        %v299 = vadd.f32 %v295, %v298
        %v300 = vstv %s286
        %v301 = vmul.f32 %v300, %v293
        %s302 = ssub.f32 1.0, %s286
        %v303 = vmul.f32 %v291, %v291
        %v304 = vstv %s302
        %v305 = vmul.f32 %v304, %v303
        %v306 = vadd.f32 %v301, %v305
        %v307 = vrsqrt.pop %v306
        %v308 = vmul.f32 %v306, %v307
        %vm309 = vcmp.eq.f32.partialorder %v306, inf
        %v310 = vsel %vm309, %v306, %v308
        %vm311 = vcmp.eq.f32.partialorder %v306, 0.0
        %v312 = vand.u32 %v306, 2147483648
        %v313 = vsel %vm311, %v312, %v310
        %v314 = vstv %s289
        %v315 = vmul.f32 %v313, %v314
        %v316 = vstv %s287
        %v317 = vadd.f32 %v315, %v316
        %v318 = vstv %s288
        %v319 = vmul.f32 %v318, %v299
        %v320 = vrcp.pop %v317
        %v321 = vmul.f32 %v319, %v320
        %v322 = vsub.f32 %v290, %v321
        %323 = vst [vmem:[%s284] sm:$0xff] %v322
        %p324 = scmp.lt.s32.totalorder %s17, 1
        %s325 = scalar_select %p324, %s17, 1
        %s326 = smul.addr %s325, 8
        %s327 = scalar_lea.vmem %s5, %s326
        // Predicated region
        $region45: #{adam_update.1} parent=39 // pred_check
          %p328 = pneg %p160
        $region46: #{adam_update.1} parent=39 // pred_check_branch
          %330 = sbr.rel (%p328) target = $region48
        $region47: #{adam_update.1} parent=39 // pred_region
          _
        $region48: #{adam_update.1} parent=39 // pred_fallthru
          _
      $region40: #{adam_update.1} parent=5 // pred_fallthru
        _
      %p331 = scmp.le.s32.totalorder 2, %s12
      // Predicated region
      $region49: #{adam_update.1} parent=5 // pred_check
        %p332 = pneg %p331
      $region50: #{adam_update.1} parent=5 // pred_check_branch
        %334 = sbr.rel (%p332) target = $region52
      $region51: #{adam_update.1} parent=5 // pred_region
        %s335 = ssub.s32 %s12, 2
        // Predicated region
        $region53: #{adam_update.1} parent=51 // pred_check
          %p336 = pneg %p166
        $region54: #{adam_update.1} parent=51 // pred_check_branch
          %338 = sbr.rel (%p336) target = $region56
        $region55: #{adam_update.1} parent=51 // pred_region
          %p339 = scmp.lt.s32.totalorder %s18, 1
          %s340 = scalar_select %p339, %s18, 1
          %s341 = smul.addr %s340, 8
          %s342 = scalar_lea.vmem %s5, %s341
        $region56: #{adam_update.1} parent=51 // pred_fallthru
          _
      $region52: #{adam_update.1} parent=5 // pred_fallthru
        _
    $region6: #{adam_update.1} parent=1 // loop_footer
      %s16 = sadd.s32 1, %s12
    $region7: #{adam_update.1} parent=1 // loop_footer_branch
      %11 = sbr.rel target = $region3
    $region8: #{adam_update.1} parent=1 // loop_exit
      _
    %343 = vsyncpa [#allocation3], 1
    %s344 = scalar_lea.sflag [#allocation3], 1
    %345 = vsyncpa %s344, 1

</llo_original>
